<compile_context>
chip_gen: v7x
topology: tpu7x:2x2x1
jax: 0.10.0
libtpu: 0.0.40
codegen_flags: <defaults>
</compile_context>

<pallas_src>
import math
import functools

import jax
import jax.numpy as jnp
from jax.experimental import pallas as pl
from jax.experimental.pallas import tpu as pltpu

INV_SQRT_2 = 1.0 / math.sqrt(2.0)
SILU_SCALE = 1.0 / 0.6  # ScaledSiLU scale factor


# ----------------------------------------------------------------------------
# Parameter initialization: he_orthogonal_init reproduced in JAX
# ----------------------------------------------------------------------------
def _standardize(kernel):
    """N*Var(W) = 1, E[W] = 0 (unbiased var, along axis=1 for 2-D weights)."""
    eps = 1e-6
    mean = jnp.mean(kernel, axis=1, keepdims=True)
    var = jnp.var(kernel, axis=1, keepdims=True, ddof=1)
    return (kernel - mean) / jnp.sqrt(var + eps)


def he_orthogonal_init(key, shape, dtype=jnp.float32):
    """(Semi-)orthogonal init, standardized, scaled by sqrt(1/fan_in)."""
    w = jax.nn.initializers.orthogonal()(key, shape, dtype)
    fan_in = shape[1]
    w = _standardize(w)
    return w * (1.0 / fan_in) ** 0.5


# ----------------------------------------------------------------------------
# Small helpers
# ----------------------------------------------------------------------------
def _round_up(v, m):
    return (v + m - 1) // m * m


def _cdiv(a, b):
    return (a + b - 1) // b


def _vmem_capacity_bytes():
    try:
        return int(pltpu.get_tpu_info().vmem_capacity_bytes)
    except Exception:
        return 64 * 1024 * 1024  # conservative (v7x per-TensorCore VMEM)


def _pick_tile_n(u_pad, bytes_x, bytes_out, bytes_w, vmem_cap):
    """Row-tile size: as large as comfortably fits the scoped-VMEM budget."""
    w_bytes = 2 * u_pad * u_pad * bytes_w                     # resident weights
    per_row = u_pad * (2 * bytes_x + 2 * bytes_out            # 2x-buffered x/out
                       + 4 + 2 * bytes_w)                     # f32 h + dtype casts
    budget = max(8 * per_row, int(0.45 * vmem_cap) - w_bytes)
    tn = budget // per_row
    return int(max(8, min(2048, (tn // 8) * 8)))


# ----------------------------------------------------------------------------
# Weight preparation (do this ONCE at parameter-build time, not per call):
# pad the feature dim up to a multiple of 128, cast to the MXU operand dtype,
# and transpose PyTorch (out, in) -> (in, out) so the kernel is a plain x @ W.
# ----------------------------------------------------------------------------
def prepare_weights(w1, w2, compute_dtype=jnp.bfloat16):
    u_out, u_in = w1.shape
    assert u_out == u_in and w2.shape == w1.shape
    u_pad = _round_up(u_in, 128)

    def prep(w):
        wt = jnp.asarray(w).T.astype(compute_dtype)           # (in, out)
        if u_pad != u_in:
            # Zero padding is exactly neutral through both layers (SiLU(0)=0).
            wt = jnp.zeros((u_pad, u_pad), compute_dtype).at[:u_in, :u_out].set(wt)
        return wt

    return prep(w1), prep(w2)


# ----------------------------------------------------------------------------
# Pallas kernel: two Dense(units, units, bias=False, ScaledSiLU) layers +
# residual add + 1/sqrt(2) scaling, fused.  One row-tile per grid step.
# ----------------------------------------------------------------------------
def _residual_layer_kernel(x_ref, w1_ref, w2_ref, o_ref):
    compute_dtype = w1_ref.dtype

    x = x_ref[...]                                   # (TILE_N, U_pad), stream dtype
    xc = x.astype(compute_dtype)

    # Dense 1: x @ W1, weights pre-transposed to (in, out) -> plain MXU
    # contraction, no in-kernel relayout. Accumulate in f32.
    h = jnp.dot(xc, w1_ref[...], preferred_element_type=jnp.float32)

    # ScaledSiLU in the MXU operand dtype: the result feeds matmul 2 in that
    # dtype anyway; bf16 EUP/VPU (v6e/v7x) halves the transcendental work.
    h = h.astype(compute_dtype)
    h = h * jax.nn.sigmoid(h) * SILU_SCALE

    # Dense 2, then final ScaledSiLU + residual + 1/sqrt(2) kept in f32.
    h = jnp.dot(h, w2_ref[...], preferred_element_type=jnp.float32)
    h = h * jax.nn.sigmoid(h) * SILU_SCALE
    o_ref[...] = ((x.astype(jnp.float32) + h) * INV_SQRT_2).astype(o_ref.dtype)


@functools.partial(jax.jit, static_argnames=("tile_n", "out_dtype"))
def residual_layer_prepared(x, w1t, w2t, *, tile_n=None, out_dtype=None):
    """x: (N, U); w1t/w2t: padded (U_pad, U_pad) (in, out) weights from
    prepare_weights().  The MXU operand dtype is the prepared-weight dtype
    (bf16 recommended on all generations; v5e f32 matmuls take extra passes).
    out_dtype=None keeps x.dtype; pass bf16 x / out_dtype=bf16 to halve HBM
    traffic in this bandwidth-bound kernel."""
    n, u = x.shape
    u_pad = w1t.shape[0]
    out_dtype = x.dtype if out_dtype is None else out_dtype

    itm_x = jnp.dtype(x.dtype).itemsize
    itm_o = jnp.dtype(out_dtype).itemsize
    itm_w = jnp.dtype(w1t.dtype).itemsize
    vmem_cap = _vmem_capacity_bytes()

    # --- Row tiling: balanced tiles, even tile count (v7x megacore), mult of 8.
    if tile_n is None:
        tile_n = _pick_tile_n(u_pad, itm_x, itm_o, itm_w, vmem_cap)
    else:
        tile_n = max(8, _round_up(int(tile_n), 8))
    num_tiles = _cdiv(n, tile_n)
    if num_tiles > 1 and num_tiles % 2 == 1:
        num_tiles += 1            # both v7x TensorCores busy; ~free on 1-TC parts
    tn = _round_up(_cdiv(n, num_tiles), 8)
    n_pad = tn * num_tiles

    # --- Pad x (zero padding is neutral; padded outputs are sliced away).
    if (n_pad, u_pad) != (n, u):
        x_p = jnp.zeros((n_pad, u_pad), x.dtype).at[:n, :u].set(x)
    else:
        x_p = x

    # --- VMEM budget: single-buffered weights, double-buffered x/out tiles,
    #     plus in-kernel intermediates (f32 h + compute-dtype casts).
    w_bytes = 2 * u_pad * u_pad * itm_w
    io_bytes = 2 * tn * u_pad * (itm_x + itm_o)
    tmp_bytes = tn * u_pad * (4 + 2 * itm_w)
    vmem_bytes = w_bytes + io_bytes + tmp_bytes
    vmem_limit = int(min(max(int(1.4 * vmem_bytes), 16 * 1024 * 1024),
                         int(0.9 * vmem_cap)))

    out_p = pl.pallas_call(
        _residual_layer_kernel,
        out_shape=jax.ShapeDtypeStruct((n_pad, u_pad), out_dtype),
        grid=(num_tiles,),
        in_specs=[
            pl.BlockSpec((tn, u_pad), lambda i: (i, 0)),          # x row tiles
            # Whole weight arrays resident in VMEM: fetched once, single-buffered.
            pl.BlockSpec(memory_space=pltpu.MemorySpace.VMEM),    # W1
            pl.BlockSpec(memory_space=pltpu.MemorySpace.VMEM),    # W2
        ],
        out_specs=pl.BlockSpec((tn, u_pad), lambda i: (i, 0)),
        compiler_params=pltpu.CompilerParams(
            dimension_semantics=("parallel",),   # independent row tiles (2 TCs on v7x)
            vmem_limit_bytes=vmem_limit,
        ),
    )(x_p, w1t, w2t)

    return out_p[:n, :u]


def residual_layer(x, w1, w2, *, tile_n=None, compute_dtype=jnp.bfloat16,
                   out_dtype=None):
    """Convenience wrapper taking PyTorch-layout (out, in) weights.
    For repeated calls, hoist prepare_weights() out of the hot path."""
    w1t, w2t = prepare_weights(w1, w2, compute_dtype)
    return residual_layer_prepared(x, w1t, w2t, tile_n=tile_n, out_dtype=out_dtype)


# ----------------------------------------------------------------------------
# Pure-JAX reference (mirrors the PyTorch module forward exactly)
# ----------------------------------------------------------------------------
def residual_layer_ref(x, w1, w2):
    def dense(h, w):
        h = h @ w.T                          # torch.nn.Linear (bias=False)
        return jax.nn.silu(h) * SILU_SCALE   # ScaledSiLU
    h = dense(x, w1)
    h = dense(h, w2)
    return (x + h) * INV_SQRT_2


if __name__ == "__main__":
    units = 32
    n = 8  # number of "atoms" / rows

    key = jax.random.PRNGKey(0)
    kx, k1, k2 = jax.random.split(key, 3)

    x = jax.random.normal(kx, (n, units), dtype=jnp.float32)
    # Dense weights are (out_features, in_features) = (units, units)
    w1 = he_orthogonal_init(k1, (units, units))
    w2 = he_orthogonal_init(k2, (units, units))

    ref = residual_layer_ref(x, w1, w2)

    # f32 MXU operands: tight check vs reference.
    w1_f32, w2_f32 = prepare_weights(w1, w2, jnp.float32)
    out_f32 = residual_layer_prepared(x, w1_f32, w2_f32)
    jax.block_until_ready(out_f32)
    assert out_f32.shape == (n, units) and out_f32.dtype == jnp.float32
    assert jnp.allclose(out_f32, ref, atol=1e-4, rtol=1e-4), "f32 mismatch vs reference"

    # Default: bf16 MXU operands + f32 accumulation, f32 x/out streaming.
    w1_bf, w2_bf = prepare_weights(w1, w2, jnp.bfloat16)
    out_bf = residual_layer_prepared(x, w1_bf, w2_bf)
    jax.block_until_ready(out_bf)
    assert out_bf.shape == (n, units) and out_bf.dtype == jnp.float32
    assert jnp.allclose(out_bf, ref, atol=5e-2, rtol=5e-2), "bf16 mismatch vs reference"

    # bf16 streaming I/O (halves HBM traffic; use when activations live in bf16).
    x_bf = x.astype(jnp.bfloat16)
    out_stream = residual_layer_prepared(x_bf, w1_bf, w2_bf, out_dtype=jnp.bfloat16)
    jax.block_until_ready(out_stream)
    assert out_stream.shape == (n, units) and out_stream.dtype == jnp.bfloat16
    assert jnp.allclose(out_stream.astype(jnp.float32), ref, atol=1e-1, rtol=1e-1), \
        "bf16-streaming mismatch vs reference"

    print("KERNEL_OK")
</pallas_src>

<mosaic_0001>
module attributes {stable_mosaic.version = 11 : i64} {
  func.func @_residual_layer_kernel(%arg0: i32, %arg1: memref<8x128xf32, #tpu.memory_space<vmem>>, %arg2: memref<128x128xf32, #tpu.memory_space<vmem>>, %arg3: memref<128x128xf32, #tpu.memory_space<vmem>>, %arg4: memref<8x128xf32, #tpu.memory_space<vmem>>) attributes {dimension_semantics = [#tpu.dimension_semantics<parallel>], iteration_bounds = array<i64: 1>, scalar_prefetch = 0 : i64, scratch_operands = 0 : i64, tpu.core_type = #tpu.core_type<tc>, window_params = [{transform_indices = @transform_0, window_bounds = array<i64: 8, 128>}, {pipeline_mode = #tpu.pipeline_mode<synchronous>, transform_indices = @transform_1, window_bounds = array<i64: 128, 128>}, {pipeline_mode = #tpu.pipeline_mode<synchronous>, transform_indices = @transform_2, window_bounds = array<i64: 128, 128>}, {transform_indices = @transform_3, window_bounds = array<i64: 8, 128>}]} {
    %c0 = arith.constant 0 : index
    %c0_0 = arith.constant 0 : index
    %0 = vector.load %arg1[%c0, %c0_0] : memref<8x128xf32, #tpu.memory_space<vmem>>, vector<8x128xf32>
    %c0_1 = arith.constant 0 : index
    %c0_2 = arith.constant 0 : index
    %1 = vector.load %arg2[%c0_1, %c0_2] : memref<128x128xf32, #tpu.memory_space<vmem>>, vector<128x128xf32>
    %cst = arith.constant dense<0.000000e+00> : vector<8x128xf32>
    %2 = tpu.matmul %0, %1, %cst {dimension_numbers = #tpu.dot_dimension_numbers<[1], [0], [0], [1], [0, 0, 1, 1], [], []>} : vector<8x128xf32>, vector<128x128xf32>, vector<8x128xf32> -> vector<8x128xf32>
    %3 = arith.negf %2 : vector<8x128xf32>
    %4 = math.exp %3 : vector<8x128xf32>
    %cst_3 = arith.constant 1.000000e+00 : f32
    %5 = vector.broadcast %cst_3 : f32 to vector<8x128xf32>
    %6 = arith.addf %5, %4 : vector<8x128xf32>
    %7 = arith.divf %5, %6 : vector<8x128xf32>
    %8 = arith.mulf %2, %7 : vector<8x128xf32>
    %cst_4 = arith.constant 1.66666663 : f32
    %9 = vector.broadcast %cst_4 : f32 to vector<8x128xf32>
    %10 = arith.mulf %8, %9 : vector<8x128xf32>
    %c0_5 = arith.constant 0 : index
    %c0_6 = arith.constant 0 : index
    %11 = vector.load %arg3[%c0_5, %c0_6] : memref<128x128xf32, #tpu.memory_space<vmem>>, vector<128x128xf32>
    %cst_7 = arith.constant dense<0.000000e+00> : vector<8x128xf32>
    %12 = tpu.matmul %10, %11, %cst_7 {dimension_numbers = #tpu.dot_dimension_numbers<[1], [0], [0], [1], [0, 0, 1, 1], [], []>} : vector<8x128xf32>, vector<128x128xf32>, vector<8x128xf32> -> vector<8x128xf32>
    %13 = arith.negf %12 : vector<8x128xf32>
    %14 = math.exp %13 : vector<8x128xf32>
    %cst_8 = arith.constant 1.000000e+00 : f32
    %15 = vector.broadcast %cst_8 : f32 to vector<8x128xf32>
    %16 = arith.addf %15, %14 : vector<8x128xf32>
    %17 = arith.divf %15, %16 : vector<8x128xf32>
    %18 = arith.mulf %12, %17 : vector<8x128xf32>
    %cst_9 = arith.constant 1.66666663 : f32
    %19 = vector.broadcast %cst_9 : f32 to vector<8x128xf32>
    %20 = arith.mulf %18, %19 : vector<8x128xf32>
    %21 = arith.addf %0, %20 : vector<8x128xf32>
    %cst_10 = arith.constant 0.707106769 : f32
    %22 = vector.broadcast %cst_10 : f32 to vector<8x128xf32>
    %23 = arith.mulf %21, %22 : vector<8x128xf32>
    %c0_11 = arith.constant 0 : index
    %c0_12 = arith.constant 0 : index
    %24 = vector.load %arg4[%c0_11, %c0_12] : memref<8x128xf32, #tpu.memory_space<vmem>>, vector<8x128xf32>
    tpu.vector_store %arg4[%c0_11, %c0_12], %23 {strides = array<i32>} : memref<8x128xf32, #tpu.memory_space<vmem>>, vector<8x128xf32>,
    return
  }
  func.func @transform_0(%arg0: i32) -> (i32, i32) {
    %c0_i32 = arith.constant 0 : i32
    %c0_i32_0 = arith.constant 0 : i32
    return %arg0, %c0_i32 : i32, i32
  }
  func.func @transform_1(%arg0: i32) -> (i32, i32) {
    %c0_i32 = arith.constant 0 : i32
    %c0_i32_0 = arith.constant 0 : i32
    %c0_i32_1 = arith.constant 0 : i32
    return %c0_i32, %c0_i32_0 : i32, i32
  }
  func.func @transform_2(%arg0: i32) -> (i32, i32) {
    %c0_i32 = arith.constant 0 : i32
    %c0_i32_0 = arith.constant 0 : i32
    %c0_i32_1 = arith.constant 0 : i32
    return %c0_i32, %c0_i32_0 : i32, i32
  }
  func.func @transform_3(%arg0: i32) -> (i32, i32) {
    %c0_i32 = arith.constant 0 : i32
    %c0_i32_0 = arith.constant 0 : i32
    return %arg0, %c0_i32 : i32, i32
  }
}

</mosaic_0001>

<llo_original>
// kernel: residual_layer_prepared.1
$region0: #{residual_layer_prepared.1}
  #allocation0 [shape = 'u32[]', space=smem, size = 0x4, offset = 0x4, fixed_abs, tag = 'smem constant byte address 0x4 - core index']
  #allocation1 [shape = 'u32[144,128]{1,0:T(1,128)}', space=vmem, size = 0x12000, scoped, tag = 'internal scratch']
  %s0 = inlined_call_operand.vmem [shape: f32[8,128], index: 0, kind: input, shape index: {}]
  %s1 = inlined_call_operand.hbm [shape: f32[128,128], index: 1, kind: input, shape index: {}]
  %s2 = inlined_call_operand.hbm [shape: f32[128,128], index: 2, kind: input, shape index: {}]
  %s3 = inlined_call_operand.hbm [shape: f32[8,128], index: 3, kind: output, shape index: {}]
  %s4 = sld [smem:[#allocation0]]
  $region30: #{residual_layer_prepared.1} parent=0
    _
  %s6 = ssub.s32 1, %s4
  %s7 = scalar_select 0, %s6, %s4
  $region1: #{residual_layer_prepared.1} parent=0
    #allocation2 [shape = 'u8[65536]{0}', space=vmem, size = 0x10000, scoped, tag = 'input window, operand 1, single buffered']
    #allocation3 [shape = 's32[1]{0}', space=sflag, size = 0x4, scoped, tag = 'scoped memory for residual_layer_prepared.1']
    #allocation4 [shape = 's32[1]{0}', space=sflag, size = 0x4, scoped, tag = 'scoped memory for residual_layer_prepared.1']
    #allocation5 [shape = 'u8[65536]{0}', space=vmem, size = 0x10000, scoped, tag = 'input window, operand 2, single buffered']
    #allocation6 [shape = 's32[1]{0}', space=sflag, size = 0x4, scoped, tag = 'scoped memory for residual_layer_prepared.1']
    #allocation7 [shape = 'u8[4096]{0}', space=vmem, size = 0x1000, scoped, tag = 'output window, operand 0, single buffered']
    %8 = vsyncpa [#allocation3], 0
    %9 = vsyncpa [#allocation6], 0
    %10 = vsyncpa [#allocation4], 0
    // Predicated region
    $region2: #{residual_layer_prepared.1} parent=1 // pred_check
      _
    $region3: #{residual_layer_prepared.1} parent=1 // pred_check_branch
      %12 = sbr.rel (0) target = $region5
    $region4: #{residual_layer_prepared.1} parent=1 // pred_region
      _
    $region5: #{residual_layer_prepared.1} parent=1 // pred_fallthru
      _
    // Predicated region
    $region6: #{residual_layer_prepared.1} parent=1 // pred_check
      _
    $region7: #{residual_layer_prepared.1} parent=1 // pred_check_branch
      %14 = sbr.rel (0) target = $region9
    $region8: #{residual_layer_prepared.1} parent=1 // pred_region
      %s16 = ssub.s32 2048, 2048
      %17 = vsyncadd [#allocation3], %s16
      %s18 = sshll.u32 [#allocation2], 4
      %s19 = int_to_ptr.vmem [resolvable:$true] %s18
      %24 = dma.hbm_to_vmem [thread:$0]  %s1, 2048, %s19, [#allocation3], 128, 128, 8
    $region9: #{residual_layer_prepared.1} parent=1 // pred_fallthru
      _
    // Predicated region
    $region10: #{residual_layer_prepared.1} parent=1 // pred_check
      _
    $region11: #{residual_layer_prepared.1} parent=1 // pred_check_branch
      %26 = sbr.rel (0) target = $region13
    $region12: #{residual_layer_prepared.1} parent=1 // pred_region
      %s28 = ssub.s32 2048, 2048
      %29 = vsyncadd [#allocation6], %s28
      %s30 = sshll.u32 [#allocation5], 4
      %s31 = int_to_ptr.vmem [resolvable:$true] %s30
      %36 = dma.hbm_to_vmem [thread:$0]  %s2, 2048, %s31, [#allocation6], 128, 128, 8
    $region13: #{residual_layer_prepared.1} parent=1 // pred_fallthru
      _
    // Predicated region
    $region14: #{residual_layer_prepared.1} parent=1 // pred_check
      _
    $region15: #{residual_layer_prepared.1} parent=1 // pred_check_branch
      %38 = sbr.rel (0) target = $region17
    $region16: #{residual_layer_prepared.1} parent=1 // pred_region
      %39 = dma.done [#allocation3], 2048
    $region17: #{residual_layer_prepared.1} parent=1 // pred_fallthru
      _
    // Predicated region
    $region18: #{residual_layer_prepared.1} parent=1 // pred_check
      _
    $region19: #{residual_layer_prepared.1} parent=1 // pred_check_branch
      %41 = sbr.rel (0) target = $region21
    $region20: #{residual_layer_prepared.1} parent=1 // pred_region
      %42 = dma.done [#allocation6], 2048
    $region21: #{residual_layer_prepared.1} parent=1 // pred_fallthru
      _
    %v43 = vld [vmem:[%s0] sm:$0xff]
    %v44 = vld [vmem:[#allocation2] sm:$0xff]
    %v45 = vld [vmem:[#allocation2 + $0x8] sm:$0xff]
    %v46 = vld [vmem:[#allocation2 + $0x10] sm:$0xff]
    %v47 = vld [vmem:[#allocation2 + $0x18] sm:$0xff]
    %v48 = vld [vmem:[#allocation2 + $0x20] sm:$0xff]
    %v49 = vld [vmem:[#allocation2 + $0x28] sm:$0xff]
    %v50 = vld [vmem:[#allocation2 + $0x30] sm:$0xff]
    %v51 = vld [vmem:[#allocation2 + $0x38] sm:$0xff]
    %v52 = vld [vmem:[#allocation2 + $0x40] sm:$0xff]
    %v53 = vld [vmem:[#allocation2 + $0x48] sm:$0xff]
    %v54 = vld [vmem:[#allocation2 + $0x50] sm:$0xff]
    %v55 = vld [vmem:[#allocation2 + $0x58] sm:$0xff]
    %v56 = vld [vmem:[#allocation2 + $0x60] sm:$0xff]
    %v57 = vld [vmem:[#allocation2 + $0x68] sm:$0xff]
    %v58 = vld [vmem:[#allocation2 + $0x70] sm:$0xff]
    %v59 = vld [vmem:[#allocation2 + $0x78] sm:$0xff]
    %60 = vmatprep.subr.mxu0 0.0
    %61 = vmatpush1.msra.mxu0 %v44
    %62 = vmatprep.subr.mxu0 0.0
    %63 = vmatpush1.msra.mxu0 %v45
    %64 = vmatprep.subr.mxu0 0.0
    %65 = vmatpush1.msra.mxu0 %v46
    %66 = vmatprep.subr.mxu0 0.0
    %67 = vmatpush1.msra.mxu0 %v47
    %68 = vmatprep.subr.mxu0 0.0
    %69 = vmatpush1.msra.mxu0 %v48
    %70 = vmatprep.subr.mxu0 0.0
    %71 = vmatpush1.msra.mxu0 %v49
    %72 = vmatprep.subr.mxu0 0.0
    %73 = vmatpush1.msra.mxu0 %v50
    %74 = vmatprep.subr.mxu0 0.0
    %75 = vmatpush1.msra.mxu0 %v51
    %76 = vmatprep.subr.mxu0 0.0
    %77 = vmatpush1.msra.mxu0 %v52
    %78 = vmatprep.subr.mxu0 0.0
    %79 = vmatpush1.msra.mxu0 %v53
    %80 = vmatprep.subr.mxu0 0.0
    %81 = vmatpush1.msra.mxu0 %v54
    %82 = vmatprep.subr.mxu0 0.0
    %83 = vmatpush1.msra.mxu0 %v55
    %84 = vmatprep.subr.mxu0 0.0
    %85 = vmatpush1.msra.mxu0 %v56
    %86 = vmatprep.subr.mxu0 0.0
    %87 = vmatpush1.msra.mxu0 %v57
    %88 = vmatprep.subr.mxu0 0.0
    %89 = vmatpush1.msra.mxu0 %v58
    %90 = vmatprep.subr.mxu0 0.0
    %91 = vmatpush1.msra.mxu0 %v59
    %92 = vmatprep.subr.mxu0 0.0
    %93 = vmatpush1.msra.mxu0 0.0
    %94 = vmatprep.subr.mxu0 0.0
    %95 = vmatpush1.msra.mxu0 0.0
    %96 = vmatprep.subr.mxu0 0.0
    %97 = vmatpush1.msra.mxu0 0.0
    %98 = vmatprep.subr.mxu0 0.0
    %99 = vmatpush1.msra.mxu0 0.0
    %100 = vmatprep.subr.mxu0 0.0
    %101 = vmatpush1.msra.mxu0 0.0
    %102 = vmatprep.subr.mxu0 0.0
    %103 = vmatpush1.msra.mxu0 0.0
    %104 = vmatprep.subr.mxu0 0.0
    %105 = vmatpush1.msra.mxu0 0.0
    %106 = vmatprep.subr.mxu0 0.0
    %107 = vmatpush1.msra.mxu0 0.0
    %108 = vmatprep.subr.mxu0 0.0
    %109 = vmatpush1.msra.mxu0 0.0
    %110 = vmatprep.subr.mxu0 0.0
    %111 = vmatpush1.msra.mxu0 0.0
    %112 = vmatprep.subr.mxu0 0.0
    %113 = vmatpush1.msra.mxu0 0.0
    %114 = vmatprep.subr.mxu0 0.0
    %115 = vmatpush1.msra.mxu0 0.0
    %116 = vmatprep.subr.mxu0 0.0
    %117 = vmatpush1.msra.mxu0 0.0
    %118 = vmatprep.subr.mxu0 0.0
    %119 = vmatpush1.msra.mxu0 0.0
    %120 = vmatprep.subr.mxu0 0.0
    %121 = vmatpush1.msra.mxu0 0.0
    %122 = vmatprep.subr.mxu0 0.0
    %123 = vmatpush1.msra.mxu0 0.0
    %124 = vmatprep.mubr.f32.mxu0 0.0
    %125 = vmatmul.mubr.f32.gmra.mrb[0].mxu0 %v43
    %v126 = vpop.f32.mrb[0].mxu0
    %v127 = vadd.f32 0.0, %v126
    %v128 = vpop.f32.mrb[0].mxu0
    %129 = vdwg.mxu0
    %v130 = vxor.u32 %v127, 2147483648
    %v131 = vmul.f32 %v130, 1.442695
    %v132 = vpow.pop %v131
    %v133 = vadd.f32 %v132, 1.0
    %v134 = vrcp.pop %v133
    %v135 = vmul.f32 1.0, %v134
    %v136 = vmul.f32 %v127, %v135
    %v137 = vmul.f32 %v136, 1.6666666
    %v138 = vld [vmem:[#allocation5] sm:$0xff]
    %v139 = vld [vmem:[#allocation5 + $0x8] sm:$0xff]
    %v140 = vld [vmem:[#allocation5 + $0x10] sm:$0xff]
    %v141 = vld [vmem:[#allocation5 + $0x18] sm:$0xff]
    %v142 = vld [vmem:[#allocation5 + $0x20] sm:$0xff]
    %v143 = vld [vmem:[#allocation5 + $0x28] sm:$0xff]
    %v144 = vld [vmem:[#allocation5 + $0x30] sm:$0xff]
    %v145 = vld [vmem:[#allocation5 + $0x38] sm:$0xff]
    %v146 = vld [vmem:[#allocation5 + $0x40] sm:$0xff]
    %v147 = vld [vmem:[#allocation5 + $0x48] sm:$0xff]
    %v148 = vld [vmem:[#allocation5 + $0x50] sm:$0xff]
    %v149 = vld [vmem:[#allocation5 + $0x58] sm:$0xff]
    %v150 = vld [vmem:[#allocation5 + $0x60] sm:$0xff]
    %v151 = vld [vmem:[#allocation5 + $0x68] sm:$0xff]
    %v152 = vld [vmem:[#allocation5 + $0x70] sm:$0xff]
    %v153 = vld [vmem:[#allocation5 + $0x78] sm:$0xff]
    %154 = vmatprep.subr.mxu0 0.0
    %155 = vmatpush1.msra.mxu0 %v138
    %156 = vmatprep.subr.mxu0 0.0
    %157 = vmatpush1.msra.mxu0 %v139
    %158 = vmatprep.subr.mxu0 0.0
    %159 = vmatpush1.msra.mxu0 %v140
    %160 = vmatprep.subr.mxu0 0.0
    %161 = vmatpush1.msra.mxu0 %v141
    %162 = vmatprep.subr.mxu0 0.0
    %163 = vmatpush1.msra.mxu0 %v142
    %164 = vmatprep.subr.mxu0 0.0
    %165 = vmatpush1.msra.mxu0 %v143
    %166 = vmatprep.subr.mxu0 0.0
    %167 = vmatpush1.msra.mxu0 %v144
    %168 = vmatprep.subr.mxu0 0.0
    %169 = vmatpush1.msra.mxu0 %v145
    %170 = vmatprep.subr.mxu0 0.0
    %171 = vmatpush1.msra.mxu0 %v146
    %172 = vmatprep.subr.mxu0 0.0
    %173 = vmatpush1.msra.mxu0 %v147
    %174 = vmatprep.subr.mxu0 0.0
    %175 = vmatpush1.msra.mxu0 %v148
    %176 = vmatprep.subr.mxu0 0.0
    %177 = vmatpush1.msra.mxu0 %v149
    %178 = vmatprep.subr.mxu0 0.0
    %179 = vmatpush1.msra.mxu0 %v150
    %180 = vmatprep.subr.mxu0 0.0
    %181 = vmatpush1.msra.mxu0 %v151
    %182 = vmatprep.subr.mxu0 0.0
    %183 = vmatpush1.msra.mxu0 %v152
    %184 = vmatprep.subr.mxu0 0.0
    %185 = vmatpush1.msra.mxu0 %v153
    %186 = vmatprep.subr.mxu0 0.0
    %187 = vmatpush1.msra.mxu0 0.0
    %188 = vmatprep.subr.mxu0 0.0
    %189 = vmatpush1.msra.mxu0 0.0
    %190 = vmatprep.subr.mxu0 0.0
    %191 = vmatpush1.msra.mxu0 0.0
    %192 = vmatprep.subr.mxu0 0.0
    %193 = vmatpush1.msra.mxu0 0.0
    %194 = vmatprep.subr.mxu0 0.0
    %195 = vmatpush1.msra.mxu0 0.0
    %196 = vmatprep.subr.mxu0 0.0
    %197 = vmatpush1.msra.mxu0 0.0
    %198 = vmatprep.subr.mxu0 0.0
    %199 = vmatpush1.msra.mxu0 0.0
    %200 = vmatprep.subr.mxu0 0.0
    %201 = vmatpush1.msra.mxu0 0.0
    %202 = vmatprep.subr.mxu0 0.0
    %203 = vmatpush1.msra.mxu0 0.0
    %204 = vmatprep.subr.mxu0 0.0
    %205 = vmatpush1.msra.mxu0 0.0
    %206 = vmatprep.subr.mxu0 0.0
    %207 = vmatpush1.msra.mxu0 0.0
    %208 = vmatprep.subr.mxu0 0.0
    %209 = vmatpush1.msra.mxu0 0.0
    %210 = vmatprep.subr.mxu0 0.0
    %211 = vmatpush1.msra.mxu0 0.0
    %212 = vmatprep.subr.mxu0 0.0
    %213 = vmatpush1.msra.mxu0 0.0
    %214 = vmatprep.subr.mxu0 0.0
    %215 = vmatpush1.msra.mxu0 0.0
    %216 = vmatprep.subr.mxu0 0.0
    %217 = vmatpush1.msra.mxu0 0.0
    %218 = vmatprep.mubr.f32.mxu0 0.0
    %219 = vmatmul.mubr.f32.gmra.mrb[0].mxu0 %v137
    %v220 = vpop.f32.mrb[0].mxu0
    %v221 = vadd.f32 0.0, %v220
    %v222 = vpop.f32.mrb[0].mxu0
    %223 = vdwg.mxu0
    %v224 = vxor.u32 %v221, 2147483648
    %v225 = vmul.f32 %v224, 1.442695
    %v226 = vpow.pop %v225
    %v227 = vadd.f32 %v226, 1.0
    %v228 = vrcp.pop %v227
    %v229 = vmul.f32 1.0, %v228
    %v230 = vmul.f32 %v221, %v229
    %v231 = vmul.f32 %v230, 1.6666666
    %v232 = vadd.f32 %v43, %v231
    %v233 = vmul.f32 %v232, 0.70710677
    %234 = vst [vmem:[#allocation7] sm:$0xff] %v233
    // Predicated region
    $region22: #{residual_layer_prepared.1} parent=1 // pred_check
      _
    $region23: #{residual_layer_prepared.1} parent=1 // pred_check_branch
      %236 = sbr.rel (0) target = $region25
    $region24: #{residual_layer_prepared.1} parent=1 // pred_region
      %s238 = ssub.s32 128, 128
      %239 = vsyncadd [#allocation4], %s238
      %s241 = sshll.u32 [#allocation7], 4
      %s242 = int_to_ptr.vmem [resolvable:$true] %s241
      %244 = dma.vmem_to_hbm [thread:$0]  %s242, 128, %s3, [#allocation4]
    $region25: #{residual_layer_prepared.1} parent=1 // pred_fallthru
      _
    // Predicated region
    $region26: #{residual_layer_prepared.1} parent=1 // pred_check
      _
    $region27: #{residual_layer_prepared.1} parent=1 // pred_check_branch
      %246 = sbr.rel (0) target = $region29
    $region28: #{residual_layer_prepared.1} parent=1 // pred_region
      %247 = dma.done [#allocation4], 128
    $region29: #{residual_layer_prepared.1} parent=1 // pred_fallthru
      _
    %248 = vsyncpa [#allocation3], 1
    %249 = vsyncpa [#allocation6], 1
    %250 = vsyncpa [#allocation4], 1

</llo_original>
